<compile_context>
chip_gen: v7x
topology: tpu7x:2x2x1
jax: 0.10.0
libtpu: 0.0.40
codegen_flags: <defaults>
</compile_context>

<pallas_src>
import jax
import jax.numpy as jnp
from jax.experimental import pallas as pl
from jax.experimental.pallas import tpu as pltpu

_LANES = 128


def _gloss_sum_kernel(x_ref, o_ref, acc_ref):
    # x_ref  : (tm, 128)  tile of the flattened input (VMEM)
    # o_ref  : (sub, 128) per-parallel-slice partial-sum output (VMEM)
    # acc_ref: (sub, 128) f32 VMEM accumulator, persists across the reduction axis
    i = pl.program_id(1)

    @pl.when(i == 0)
    def _():
        acc_ref[...] = jnp.zeros_like(acc_ref)

    tm, lanes = x_ref.shape
    sub = acc_ref.shape[0]
    logs = jnp.log(x_ref[...].astype(jnp.float32))
    # Keep the accumulator vreg-shaped: per step this is tm//sub vreg adds
    # (VALU), no cross-lane reduce and no loop-carried scalar dependency.
    acc_ref[...] += jnp.sum(logs.reshape(tm // sub, sub, lanes), axis=0)

    @pl.when(i == pl.num_programs(1) - 1)
    def _():
        o_ref[...] = acc_ref[...]


def _round_up(x, m):
    return ((x + m - 1) // m) * m


def gloss(d_output_batch, *, tile_rows=1024, num_slices=2):
    """Pallas TPU implementation of GLoss.forward: -mean(log(x))."""
    x = d_output_batch
    n = x.size

    # Minimum sublane tile depends on dtype packing: f32 -> 8, bf16/f16 -> 16,
    # i8/fp8 -> 32.
    itemsize = jnp.dtype(x.dtype).itemsize
    sub = {4: 8, 2: 16, 1: 32}.get(itemsize, 8)

    rows = -(-n // _LANES)

    # Per-core parallel slices (leading "parallel" grid axis). Useful on v7x
    # (2 TensorCores); effectively a no-op on v5e/v6e.
    P = num_slices if rows >= num_slices * sub else 1

    # Row-tile: as large as requested (multiple of `sub`), but never larger
    # than one slice's share of the (rounded-up) rows.
    tm_target = max(sub, _round_up(tile_rows, sub))
    tm = min(tm_target, _round_up(-(-rows // P), sub))

    rows_padded = _round_up(rows, P * tm)
    steps = rows_padded // (P * tm)

    # Pad with 1.0 (log(1) == 0) so padding never perturbs the sum; the mean
    # divides by the true element count `n`. (Lane-dense reshape requires a
    # padded flat buffer, so masking in-kernel would not save the copy.)
    xf = x.reshape(-1)
    pad = rows_padded * _LANES - n
    if pad:
        xf = jnp.concatenate([xf, jnp.ones((pad,), dtype=xf.dtype)])
    x2d = xf.reshape(rows_padded, _LANES)

    partials = pl.pallas_call(
        _gloss_sum_kernel,
        out_shape=jax.ShapeDtypeStruct((P * sub, _LANES), jnp.float32),
        grid_spec=pltpu.PrefetchScalarGridSpec(
            num_scalar_prefetch=0,
            grid=(P, steps),
            in_specs=[
                pl.BlockSpec((tm, _LANES), lambda p, i: (p * steps + i, 0)),
            ],
            out_specs=pl.BlockSpec((sub, _LANES), lambda p, i: (p, 0)),
            scratch_shapes=[pltpu.VMEM((sub, _LANES), jnp.float32)],
        ),
        compiler_params=pltpu.CompilerParams(
            dimension_semantics=("parallel", "arbitrary"),
        ),
    )(x2d)

    # Single cross-lane collapse + mean + negation, done once on tiny partials.
    return -(jnp.sum(partials) / jnp.float32(n))


def gloss_ref(x):
    return -jnp.mean(jnp.log(x.astype(jnp.float32)))


if __name__ == "__main__":
    key = jax.random.PRNGKey(0)

    # d_output_batch is a discriminator output -> values in (0, 1)
    x = jax.random.uniform(
        key, (2, 4, 16, 16), dtype=jnp.float32, minval=0.05, maxval=0.95
    )
    loss = jax.block_until_ready(gloss(x))
    expected = jax.block_until_ready(gloss_ref(x))
    assert jnp.allclose(loss, expected, rtol=1e-5, atol=1e-5), (loss, expected)

    # Ragged shape exercises the padded cdiv-grid path (padding with 1.0).
    x2 = jax.random.uniform(
        jax.random.PRNGKey(1), (3, 5, 7, 11), dtype=jnp.float32,
        minval=0.05, maxval=0.95,
    )
    loss2 = jax.block_until_ready(gloss(x2))
    expected2 = jax.block_until_ready(gloss_ref(x2))
    assert jnp.allclose(loss2, expected2, rtol=1e-5, atol=1e-5), (loss2, expected2)

    # bf16 input exercises the half-HBM-bytes / 16-row sublane-tile path.
    x3 = jax.random.uniform(
        jax.random.PRNGKey(2), (4, 1, 16, 16), dtype=jnp.float32,
        minval=0.05, maxval=0.95,
    ).astype(jnp.bfloat16)
    loss3 = jax.block_until_ready(gloss(x3))
    expected3 = jax.block_until_ready(gloss_ref(x3))
    assert jnp.allclose(loss3, expected3, rtol=1e-5, atol=1e-5), (loss3, expected3)

    print("KERNEL_OK")
</pallas_src>

<mosaic_0001>
module attributes {stable_mosaic.version = 11 : i64} {
  func.func @_gloss_sum_kernel(%arg0: i32, %arg1: i32, %arg2: memref<8x128xf32, #tpu.memory_space<vmem>>, %arg3: memref<8x128xf32, #tpu.memory_space<vmem>>, %arg4: memref<8x128xf32, #tpu.memory_space<vmem>>) attributes {dimension_semantics = [#tpu.dimension_semantics<parallel>, #tpu.dimension_semantics<arbitrary>], iteration_bounds = array<i64: 2, 1>, scalar_prefetch = 0 : i64, scratch_operands = 1 : i64, tpu.core_type = #tpu.core_type<tc>, window_params = [{transform_indices = @transform_0, window_bounds = array<i64: 8, 128>}, {transform_indices = @transform_1, window_bounds = array<i64: 8, 128>}]} {
    %c0_i32 = arith.constant 0 : i32
    %0 = arith.cmpi eq, %arg1, %c0_i32 : i32
    %1 = arith.extui %0 : i1 to i32
    %c0_i32_0 = arith.constant 0 : i32
    %2 = arith.cmpi ne, %1, %c0_i32_0 : i32
    scf.if %2 {
      %cst_8 = arith.constant 0.000000e+00 : f32
      %13 = vector.broadcast %cst_8 : f32 to vector<8x128xf32>
      %c0_9 = arith.constant 0 : index
      %c0_10 = arith.constant 0 : index
      %14 = vector.load %arg4[%c0_9, %c0_10] : memref<8x128xf32, #tpu.memory_space<vmem>>, vector<8x128xf32>
      tpu.vector_store %arg4[%c0_9, %c0_10], %13 {strides = array<i32>} : memref<8x128xf32, #tpu.memory_space<vmem>>, vector<8x128xf32>,
    } else {
    }
    %c0 = arith.constant 0 : index
    %c0_1 = arith.constant 0 : index
    %3 = vector.load %arg2[%c0, %c0_1] : memref<8x128xf32, #tpu.memory_space<vmem>>, vector<8x128xf32>
    %4 = math.log %3 : vector<8x128xf32>
    %c0_2 = arith.constant 0 : index
    %c0_3 = arith.constant 0 : index
    %5 = vector.load %arg4[%c0_2, %c0_3] : memref<8x128xf32, #tpu.memory_space<vmem>>, vector<8x128xf32>
    %6 = vector.shape_cast %4 : vector<8x128xf32> to vector<1x8x128xf32>
    %cst = arith.constant dense<0.000000e+00> : vector<8x128xf32>
    %7 = vector.multi_reduction <add>, %6, %cst [0] : vector<1x8x128xf32> to vector<8x128xf32>
    %8 = arith.addf %5, %7 : vector<8x128xf32>
    %c0_4 = arith.constant 0 : index
    %c0_5 = arith.constant 0 : index
    %9 = vector.load %arg4[%c0_4, %c0_5] : memref<8x128xf32, #tpu.memory_space<vmem>>, vector<8x128xf32>
    tpu.vector_store %arg4[%c0_4, %c0_5], %8 {strides = array<i32>} : memref<8x128xf32, #tpu.memory_space<vmem>>, vector<8x128xf32>,
    %c0_i32_6 = arith.constant 0 : i32
    %10 = arith.cmpi eq, %arg1, %c0_i32_6 : i32
    %11 = arith.extui %10 : i1 to i32
    %c0_i32_7 = arith.constant 0 : i32
    %12 = arith.cmpi ne, %11, %c0_i32_7 : i32
    scf.if %12 {
      %c0_8 = arith.constant 0 : index
      %c0_9 = arith.constant 0 : index
      %13 = vector.load %arg4[%c0_8, %c0_9] : memref<8x128xf32, #tpu.memory_space<vmem>>, vector<8x128xf32>
      %c0_10 = arith.constant 0 : index
      %c0_11 = arith.constant 0 : index
      %14 = vector.load %arg3[%c0_10, %c0_11] : memref<8x128xf32, #tpu.memory_space<vmem>>, vector<8x128xf32>
      tpu.vector_store %arg3[%c0_10, %c0_11], %13 {strides = array<i32>} : memref<8x128xf32, #tpu.memory_space<vmem>>, vector<8x128xf32>,
    } else {
    }
    return
  }
  func.func @transform_0(%arg0: i32, %arg1: i32) -> (i32, i32) {
    %c1_i32 = arith.constant 1 : i32
    %0 = arith.muli %arg0, %c1_i32 : i32
    %1 = arith.addi %0, %arg1 : i32
    %c0_i32 = arith.constant 0 : i32
    %c0_i32_0 = arith.constant 0 : i32
    return %1, %c0_i32 : i32, i32
  }
  func.func @transform_1(%arg0: i32, %arg1: i32) -> (i32, i32) {
    %c0_i32 = arith.constant 0 : i32
    %c0_i32_0 = arith.constant 0 : i32
    return %arg0, %c0_i32 : i32, i32
  }
}

</mosaic_0001>

<llo_original>
// kernel: tpu_custom_call.1
$region0: #{tpu_custom_call.1}
  #allocation0 [shape = 'u32[]', space=smem, size = 0x4, offset = 0x4, fixed_abs, tag = 'smem constant byte address 0x4 - core index']
  #allocation1 [shape = 'u32[144,128]{1,0:T(1,128)}', space=vmem, size = 0x12000, scoped, tag = 'internal scratch']
  #allocation2 [shape = 'f32[8,128]{1,0:T(8,128)}', space=vmem, size = 0x1000, scoped, tag = 'scratch operand']
  %s0 = inlined_call_operand.hbm [shape: f32[16,128], index: 0, kind: input, shape index: {}]
  %s1 = inlined_call_operand.hbm [shape: f32[16,128], index: 1, kind: output, shape index: {}]
  %s2 = sld [smem:[#allocation0]]
  $region49: #{tpu_custom_call.1} parent=0
    _
  %s4 = ssub.s32 1, %s2
  %s5 = scalar_select 0, %s4, %s2
  $region1: #{tpu_custom_call.1} parent=0
    #allocation3 [shape = 'u8[8192]{0}', space=vmem, size = 0x2000, scoped, tag = 'input window, operand 0']
    #allocation4 [shape = 's32[2]{0}', space=sflag, size = 0x8, scoped, tag = 'scoped memory for tpu_custom_call.1']
    #allocation5 [shape = 's32[2]{0}', space=sflag, size = 0x8, scoped, tag = 'scoped memory for tpu_custom_call.1']
    #allocation6 [shape = 'u8[8192]{0}', space=vmem, size = 0x2000, scoped, tag = 'output window, operand 0']
    %6 = vsyncpa [#allocation4], 0
    %s7 = scalar_lea.sflag [#allocation4], 1
    %8 = vsyncpa %s7, 0
    %9 = vsyncpa [#allocation5], 0
    %s10 = scalar_lea.sflag [#allocation5], 1
    %11 = vsyncpa %s10, 0
    loop: start=0, step=1, limit=4
    $region2: #{tpu_custom_call.1} parent=1 // loop_pre_header
      _
    $region3: #{tpu_custom_call.1} parent=1 // loop_header
      %s13 = sphi 0, %s17
      %p14 = scmp.ge.s32.totalorder %s13, 4
      %s20 = sphi 0, %s32
      %s21 = sphi 0, %s28
      %s22 = sphi 0, %s20
      %s23 = sphi 0, %s21
      %s24 = sphi 0, %s22
      %s25 = sphi 0, %s23
      %s37 = sphi 0, %s39
      %s40 = sphi 0, %s37
      %s41 = sphi 0, %s40
      %s57 = sphi 0, %s41
      %s63 = sphi 0, %s65
      %s66 = sphi 0, %s63
      %s67 = sphi 0, %s66
      %s83 = sphi 0, %s67
    $region4: #{tpu_custom_call.1} parent=1 // loop_header_branch
      %16 = sbr.rel (%p14) target = $region8
    $region5: #{tpu_custom_call.1} parent=1 // loop_body
      %s18 = ssub.s32 %s13, 1
      %s19 = ssub.s32 %s13, 2
      %s26 = sadd.s32 1, %s21
      %p27 = scmp.ge.s32.totalorder %s26, 1
      %s28 = scalar_select %p27, 0, %s26
      %s29 = sadd.s32 1, %s20
      %s30 = scalar_select %p27, %s29, %s20
      %p31 = scmp.ge.s32.totalorder %s30, 2
      %s32 = scalar_select %p31, 0, %s30
      %s33 = sadd.s32 %s20, %s21
      %s34 = sadd.s32 %s32, %s28
      %s35 = ssub.s32 %s33, %s34
      %p36 = scmp.eq.s32.totalorder %s35, 0
      %s38 = sadd.s32 %s37, 1
      %s39 = scalar_select %p36, %s37, %s38
      %p42 = pneg %p36
      %p43 = scmp.eq.s32.totalorder %s13, 1
      %p44 = por %p42, %p43
      %p45 = scmp.ne.s32.totalorder %s37, %s40
      %p46 = scmp.eq.s32.totalorder %s13, 0
      %p47 = por %p45, %p46
      %p48 = scmp.ne.s32.totalorder %s37, %s40
      %p49 = scmp.eq.s32.totalorder %s18, 1
      %p50 = por %p48, %p49
      %p51 = scmp.ne.s32.totalorder %s40, %s41
      %p52 = scmp.eq.s32.totalorder %s18, 0
      %p53 = por %p51, %p52
      %p54 = scmp.ne.s32.totalorder %s40, %s41
      %p55 = scmp.eq.s32.totalorder %s19, 1
      %p56 = por %p54, %p55
      %p58 = scmp.ne.s32.totalorder %s41, %s57
      %p59 = scmp.eq.s32.totalorder %s19, 0
      %p60 = por %p58, %p59
      %s61 = ssub.s32 %s20, %s32
      %p62 = scmp.eq.s32.totalorder %s61, 0
      %s64 = sadd.s32 %s63, 1
      %s65 = scalar_select %p62, %s63, %s64
      %p68 = pneg %p62
      %p69 = scmp.eq.s32.totalorder %s13, 1
      %p70 = por %p68, %p69
      %p71 = scmp.ne.s32.totalorder %s63, %s66
      %p72 = scmp.eq.s32.totalorder %s13, 0
      %p73 = por %p71, %p72
      %p74 = scmp.ne.s32.totalorder %s63, %s66
      %p75 = scmp.eq.s32.totalorder %s18, 1
      %p76 = por %p74, %p75
      %p77 = scmp.ne.s32.totalorder %s66, %s67
      %p78 = scmp.eq.s32.totalorder %s18, 0
      %p79 = por %p77, %p78
      %p80 = scmp.ne.s32.totalorder %s66, %s67
      %p81 = scmp.eq.s32.totalorder %s19, 1
      %p82 = por %p80, %p81
      %p84 = scmp.ne.s32.totalorder %s67, %s83
      %p85 = scmp.eq.s32.totalorder %s19, 0
      %p86 = por %p84, %p85
      %p87 = scmp.le.s32.totalorder 1, %s13
      %p88 = scmp.lt.s32.totalorder %s13, 3
      %p89 = pnand %p87, %p88
      %p90 = pneg %p89
      // Predicated region
      $region9: #{tpu_custom_call.1} parent=5 // pred_check
        _
      $region10: #{tpu_custom_call.1} parent=5 // pred_check_branch
        %92 = sbr.rel (%p89) target = $region12
      $region11: #{tpu_custom_call.1} parent=5 // pred_region
        %s93 = ssub.s32 %s13, 1
      $region12: #{tpu_custom_call.1} parent=5 // pred_fallthru
        _
      %p94 = scmp.lt.s32.totalorder %s13, 2
      // Predicated region
      $region13: #{tpu_custom_call.1} parent=5 // pred_check
        %p95 = pneg %p94
      $region14: #{tpu_custom_call.1} parent=5 // pred_check_branch
        %97 = sbr.rel (%p95) target = $region16
      $region15: #{tpu_custom_call.1} parent=5 // pred_region
        // Predicated region
        $region17: #{tpu_custom_call.1} parent=15 // pred_check
          %p98 = pneg %p47
        $region18: #{tpu_custom_call.1} parent=15 // pred_check_branch
          %100 = sbr.rel (%p98) target = $region20
        $region19: #{tpu_custom_call.1} parent=15 // pred_region
          %s101 = sand.u32 %s37, 1
          %s102 = scalar_lea.sflag [#allocation4], %s101
          %s103 = sand.u32 %s37, 1
          %s104 = smul.addr %s103, 8
          %s105 = scalar_lea.vmem [#allocation3], %s104
          %s106 = sadd.s32 %s20, %s21
          %s108 = ssub.s32 128, 128
          %109 = vsyncadd %s102, %s108
          %s110 = smul.addr %s106, 128
          %s111 = scalar_lea.hbm %s0, %s110
          %s113 = sshll.u32 %s105, 4
          %s114 = int_to_ptr.vmem [resolvable:$true] %s113
          %116 = dma.hbm_to_vmem [thread:$0]  %s111, 128, %s114, %s102
        $region20: #{tpu_custom_call.1} parent=15 // pred_fallthru
          _
      $region16: #{tpu_custom_call.1} parent=5 // pred_fallthru
        _
      %p117 = scmp.le.s32.totalorder 1, %s13
      %p118 = scmp.lt.s32.totalorder %s13, 3
      %p119 = pnand %p117, %p118
      %p120 = pneg %p119
      // Predicated region
      $region21: #{tpu_custom_call.1} parent=5 // pred_check
        _
      $region22: #{tpu_custom_call.1} parent=5 // pred_check_branch
        %122 = sbr.rel (%p119) target = $region24
      $region23: #{tpu_custom_call.1} parent=5 // pred_region
        %s123 = ssub.s32 %s13, 1
        %s124 = sand.u32 %s40, 1
        %s125 = scalar_lea.sflag [#allocation4], %s124
        %s126 = sand.u32 %s40, 1
        %s127 = smul.addr %s126, 8
        %s128 = scalar_lea.vmem [#allocation3], %s127
        // Predicated region
        $region25: #{tpu_custom_call.1} parent=23 // pred_check
          %p129 = pneg %p53
        $region26: #{tpu_custom_call.1} parent=23 // pred_check_branch
          %131 = sbr.rel (%p129) target = $region28
        $region27: #{tpu_custom_call.1} parent=23 // pred_region
          %132 = dma.done %s125, 128
        $region28: #{tpu_custom_call.1} parent=23 // pred_fallthru
          _
        %s133 = sand.u32 %s40, 1
        %s134 = scalar_lea.sflag [#allocation4], %s133
        %s135 = sand.u32 %s40, 1
        %s136 = smul.addr %s135, 8
        %s137 = scalar_lea.vmem [#allocation3], %s136
        %p138 = pneg %p53
        %p139 = pneg %p50
        %p140 = pneg %p79
        %p141 = pneg %p76
        %s142 = sand.u32 %s66, 1
        %s143 = scalar_lea.sflag [#allocation5], %s142
        %s144 = sand.u32 %s66, 1
        %s145 = smul.addr %s144, 8
        %s146 = scalar_lea.vmem [#allocation6], %s145
        %s147 = sadd.s32 %s22, %s23
        %p148 = scmp.eq.s32.totalorder %s23, 0
        // Predicated region
        $region29: #{tpu_custom_call.1} parent=23 // pred_check
          %p149 = pneg %p148
        $region30: #{tpu_custom_call.1} parent=23 // pred_check_branch
          %151 = sbr.rel (%p149) target = $region32
        $region31: #{tpu_custom_call.1} parent=23 // pred_region
          %152 = vst [vmem:[#allocation2] sm:$0xff] 0.0
        $region32: #{tpu_custom_call.1} parent=23 // pred_fallthru
          _
        %v153 = vld [vmem:[%s128] sm:$0xff]
        %v154 = vlog2.pop %v153
        %v155 = vmul.f32 %v154, 0.6931472
        %v156 = vld [vmem:[#allocation2] sm:$0xff]
        %v157 = vadd.f32 %v155, 0.0
        %v158 = vadd.f32 %v156, %v157
        %159 = vst [vmem:[#allocation2] sm:$0xff] %v158
        // Predicated region
        $region33: #{tpu_custom_call.1} parent=23 // pred_check
          %p160 = pneg %p148
        $region34: #{tpu_custom_call.1} parent=23 // pred_check_branch
          %162 = sbr.rel (%p160) target = $region36
        $region35: #{tpu_custom_call.1} parent=23 // pred_region
          %v163 = vld [vmem:[#allocation2] sm:$0xff]
          %164 = vst [vmem:[%s146] sm:$0xff] %v163
        $region36: #{tpu_custom_call.1} parent=23 // pred_fallthru
          _
        %s165 = sand.u32 %s66, 1
        %s166 = scalar_lea.sflag [#allocation5], %s165
        %s167 = sand.u32 %s66, 1
        %s168 = smul.addr %s167, 8
        %s169 = scalar_lea.vmem [#allocation6], %s168
        // Predicated region
        $region37: #{tpu_custom_call.1} parent=23 // pred_check
          %p170 = pneg %p76
        $region38: #{tpu_custom_call.1} parent=23 // pred_check_branch
          %172 = sbr.rel (%p170) target = $region40
        $region39: #{tpu_custom_call.1} parent=23 // pred_region
          %s174 = ssub.s32 128, 128
          %175 = vsyncadd %s166, %s174
          %s176 = smul.addr %s22, 128
          %s177 = scalar_lea.hbm %s1, %s176
          %s179 = sshll.u32 %s169, 4
          %s180 = int_to_ptr.vmem [resolvable:$true] %s179
          %182 = dma.vmem_to_hbm [thread:$0]  %s180, 128, %s177, %s166
        $region40: #{tpu_custom_call.1} parent=23 // pred_fallthru
          _
      $region24: #{tpu_custom_call.1} parent=5 // pred_fallthru
        _
      %p183 = scmp.le.s32.totalorder 2, %s13
      // Predicated region
      $region41: #{tpu_custom_call.1} parent=5 // pred_check
        %p184 = pneg %p183
      $region42: #{tpu_custom_call.1} parent=5 // pred_check_branch
        %186 = sbr.rel (%p184) target = $region44
      $region43: #{tpu_custom_call.1} parent=5 // pred_region
        %s187 = ssub.s32 %s13, 2
        // Predicated region
        $region45: #{tpu_custom_call.1} parent=43 // pred_check
          %p188 = pneg %p82
        $region46: #{tpu_custom_call.1} parent=43 // pred_check_branch
          %190 = sbr.rel (%p188) target = $region48
        $region47: #{tpu_custom_call.1} parent=43 // pred_region
          %s191 = sand.u32 %s67, 1
          %s192 = scalar_lea.sflag [#allocation5], %s191
          %s193 = sand.u32 %s67, 1
          %s194 = smul.addr %s193, 8
          %s195 = scalar_lea.vmem [#allocation6], %s194
          %196 = dma.done %s192, 128
        $region48: #{tpu_custom_call.1} parent=43 // pred_fallthru
          _
      $region44: #{tpu_custom_call.1} parent=5 // pred_fallthru
        _
    $region6: #{tpu_custom_call.1} parent=1 // loop_footer
      %s17 = sadd.s32 1, %s13
    $region7: #{tpu_custom_call.1} parent=1 // loop_footer_branch
      %12 = sbr.rel target = $region3
    $region8: #{tpu_custom_call.1} parent=1 // loop_exit
      _
    %197 = vsyncpa [#allocation4], 1
    %s198 = scalar_lea.sflag [#allocation4], 1
    %199 = vsyncpa %s198, 1
    %200 = vsyncpa [#allocation5], 1
    %s201 = scalar_lea.sflag [#allocation5], 1
    %202 = vsyncpa %s201, 1

</llo_original>
